<compile_context>
chip_gen: v5e
topology: v5e:2x2
jax: 0.10.0
libtpu: 0.0.40
codegen_flags: <defaults>
</compile_context>

<pallas_src>
import jax
import jax.numpy as jnp
from jax.experimental import pallas as pl
from jax.experimental.pallas import tpu as pltpu

_LANE = 128


def _partial_sumsq_kernel(d_ref, b_ref, l_ref, acc_ref):
    """Accumulate (base + diff - label)^2 into a resident VMEM output block."""
    i = pl.program_id(1)  # reduction ("arbitrary") axis

    @pl.when(i == 0)
    def _init():
        acc_ref[...] = jnp.zeros_like(acc_ref)

    diff = (
        b_ref[...].astype(jnp.float32)
        + d_ref[...].astype(jnp.float32)
        - l_ref[...].astype(jnp.float32)
    )
    # Pure elementwise (VPU) accumulation; no cross-lane reduce per step.
    acc_ref[...] += (diff * diff)[None, :, :]


def _round_up(x, m):
    return (x + m - 1) // m * m


def diff_rmsle_loss(diff_preds, base, labels, *, tile_rows=1024, num_slices=2):
    """Scalar RMSE of (base + diff_preds) vs labels via a Pallas TPU kernel."""
    assert diff_preds.shape == base.shape == labels.shape
    total = diff_preds.size

    rows_needed = pl.cdiv(total, _LANE)
    # Shrink the tile for tiny inputs; keep rows a multiple of 8 (sublane).
    tile_rows = max(8, min(tile_rows, _round_up(rows_needed, 8)))
    # Never use more parallel slices than there are tiles of work.
    num_slices = max(1, min(num_slices, pl.cdiv(rows_needed, tile_rows)))
    tiles_per_slice = pl.cdiv(rows_needed, tile_rows * num_slices)
    rows_padded = num_slices * tiles_per_slice * tile_rows
    padded_total = rows_padded * _LANE

    def prep(x):
        # reshape of a contiguous array is free; keep native dtype (the kernel
        # casts on load); pad only when strictly necessary.
        x = x.reshape(-1)
        if padded_total != total:
            x = jnp.pad(x, (0, padded_total - total))
        return x.reshape(rows_padded, _LANE)

    d2, b2, l2 = prep(diff_preds), prep(base), prep(labels)

    def in_map(c, i, tps=tiles_per_slice):
        return (c * tps + i, 0)

    in_spec = pl.BlockSpec((tile_rows, _LANE), in_map)

    partials = pl.pallas_call(
        _partial_sumsq_kernel,
        out_shape=jax.ShapeDtypeStruct(
            (num_slices, tile_rows, _LANE), jnp.float32
        ),
        grid_spec=pltpu.PrefetchScalarGridSpec(
            num_scalar_prefetch=0,
            grid=(num_slices, tiles_per_slice),
            in_specs=[in_spec, in_spec, in_spec],
            # Same block index across the reduction axis -> resident VMEM
            # accumulator; one block per parallel slice (per core on v7x).
            out_specs=pl.BlockSpec(
                (1, tile_rows, _LANE), lambda c, i: (c, 0, 0)
            ),
        ),
        compiler_params=pltpu.CompilerParams(
            dimension_semantics=("parallel", "arbitrary"),
        ),
    )(d2, b2, l2)

    # Single tiny final reduce + sqrt(mean) in the wrapper (divide by the TRUE
    # element count; zero padding contributed nothing to the sum).
    return jnp.sqrt(jnp.sum(partials) / jnp.float32(total))


if __name__ == "__main__":
    key = jax.random.PRNGKey(0)
    k1, k2, k3 = jax.random.split(key, 3)

    # Small shapes consistent with the module: [bs x 3 x N x T].
    bs, C, N, T = 2, 3, 8, 16
    diff_preds = jax.random.normal(k1, (bs, C, N, T), dtype=jnp.float32)
    base = jax.random.normal(k2, (bs, C, N, T), dtype=jnp.float32)
    labels = jax.random.normal(k3, (bs, C, N, T), dtype=jnp.float32)

    loss = diff_rmsle_loss(diff_preds, base, labels)
    loss = jax.block_until_ready(loss)

    ref = jnp.sqrt(jnp.mean((base + diff_preds - labels) ** 2))
    assert jnp.allclose(loss, ref, rtol=1e-5, atol=1e-6), (loss, ref)

    # Second check exercising the multi-tile / multi-slice (2-core) path.
    k4, k5, k6 = jax.random.split(k3, 3)
    shape2 = (4, 3, 64, 128)
    d_b = jax.random.normal(k4, shape2, dtype=jnp.float32)
    b_b = jax.random.normal(k5, shape2, dtype=jnp.float32)
    l_b = jax.random.normal(k6, shape2, dtype=jnp.float32)
    loss_b = jax.block_until_ready(
        diff_rmsle_loss(d_b, b_b, l_b, tile_rows=256, num_slices=2)
    )
    ref_b = jnp.sqrt(jnp.mean((b_b + d_b - l_b) ** 2))
    assert jnp.allclose(loss_b, ref_b, rtol=1e-5, atol=1e-6), (loss_b, ref_b)

    print("KERNEL_OK")
</pallas_src>

<mosaic_0001>
module attributes {stable_mosaic.version = 11 : i64} {
  func.func @_partial_sumsq_kernel(%arg0: i32, %arg1: i32, %arg2: memref<8x128xf32, #tpu.memory_space<vmem>>, %arg3: memref<8x128xf32, #tpu.memory_space<vmem>>, %arg4: memref<8x128xf32, #tpu.memory_space<vmem>>, %arg5: memref<1x8x128xf32, #tpu.memory_space<vmem>>) attributes {dimension_semantics = [#tpu.dimension_semantics<parallel>, #tpu.dimension_semantics<arbitrary>], iteration_bounds = array<i64: 1, 1>, scalar_prefetch = 0 : i64, scratch_operands = 0 : i64, tpu.core_type = #tpu.core_type<tc>, window_params = [{transform_indices = @transform_0, window_bounds = array<i64: 8, 128>}, {transform_indices = @transform_1, window_bounds = array<i64: 8, 128>}, {transform_indices = @transform_2, window_bounds = array<i64: 8, 128>}, {transform_indices = @transform_3, window_bounds = array<i64: 1, 8, 128>}]} {
    %c0_i32 = arith.constant 0 : i32
    %0 = arith.cmpi eq, %arg1, %c0_i32 : i32
    %1 = arith.extui %0 : i1 to i32
    %c0_i32_0 = arith.constant 0 : i32
    %2 = arith.cmpi ne, %1, %c0_i32_0 : i32
    scf.if %2 {
      %cst = arith.constant 0.000000e+00 : f32
      %13 = vector.broadcast %cst : f32 to vector<1x8x128xf32>
      %c0_12 = arith.constant 0 : index
      %c0_13 = arith.constant 0 : index
      %c0_14 = arith.constant 0 : index
      %14 = vector.load %arg5[%c0_12, %c0_13, %c0_14] : memref<1x8x128xf32, #tpu.memory_space<vmem>>, vector<1x8x128xf32>
      tpu.vector_store %arg5[%c0_12, %c0_13, %c0_14], %13 {strides = array<i32>} : memref<1x8x128xf32, #tpu.memory_space<vmem>>, vector<1x8x128xf32>,
    } else {
    }
    %c0 = arith.constant 0 : index
    %c0_1 = arith.constant 0 : index
    %3 = vector.load %arg3[%c0, %c0_1] : memref<8x128xf32, #tpu.memory_space<vmem>>, vector<8x128xf32>
    %c0_2 = arith.constant 0 : index
    %c0_3 = arith.constant 0 : index
    %4 = vector.load %arg2[%c0_2, %c0_3] : memref<8x128xf32, #tpu.memory_space<vmem>>, vector<8x128xf32>
    %5 = arith.addf %3, %4 : vector<8x128xf32>
    %c0_4 = arith.constant 0 : index
    %c0_5 = arith.constant 0 : index
    %6 = vector.load %arg4[%c0_4, %c0_5] : memref<8x128xf32, #tpu.memory_space<vmem>>, vector<8x128xf32>
    %7 = arith.subf %5, %6 : vector<8x128xf32>
    %c0_6 = arith.constant 0 : index
    %c0_7 = arith.constant 0 : index
    %c0_8 = arith.constant 0 : index
    %8 = vector.load %arg5[%c0_6, %c0_7, %c0_8] : memref<1x8x128xf32, #tpu.memory_space<vmem>>, vector<1x8x128xf32>
    %9 = arith.mulf %7, %7 : vector<8x128xf32>
    %10 = vector.shape_cast %9 : vector<8x128xf32> to vector<1x8x128xf32>
    %11 = arith.addf %8, %10 : vector<1x8x128xf32>
    %c0_9 = arith.constant 0 : index
    %c0_10 = arith.constant 0 : index
    %c0_11 = arith.constant 0 : index
    %12 = vector.load %arg5[%c0_9, %c0_10, %c0_11] : memref<1x8x128xf32, #tpu.memory_space<vmem>>, vector<1x8x128xf32>
    tpu.vector_store %arg5[%c0_9, %c0_10, %c0_11], %11 {strides = array<i32>} : memref<1x8x128xf32, #tpu.memory_space<vmem>>, vector<1x8x128xf32>,
    return
  }
  func.func @transform_0(%arg0: i32, %arg1: i32) -> (i32, i32) {
    %c1_i32 = arith.constant 1 : i32
    %0 = arith.muli %arg0, %c1_i32 : i32
    %1 = arith.addi %0, %arg1 : i32
    %c0_i32 = arith.constant 0 : i32
    %c0_i32_0 = arith.constant 0 : i32
    return %1, %c0_i32 : i32, i32
  }
  func.func @transform_1(%arg0: i32, %arg1: i32) -> (i32, i32) {
    %c1_i32 = arith.constant 1 : i32
    %0 = arith.muli %arg0, %c1_i32 : i32
    %1 = arith.addi %0, %arg1 : i32
    %c0_i32 = arith.constant 0 : i32
    %c0_i32_0 = arith.constant 0 : i32
    return %1, %c0_i32 : i32, i32
  }
  func.func @transform_2(%arg0: i32, %arg1: i32) -> (i32, i32) {
    %c1_i32 = arith.constant 1 : i32
    %0 = arith.muli %arg0, %c1_i32 : i32
    %1 = arith.addi %0, %arg1 : i32
    %c0_i32 = arith.constant 0 : i32
    %c0_i32_0 = arith.constant 0 : i32
    return %1, %c0_i32 : i32, i32
  }
  func.func @transform_3(%arg0: i32, %arg1: i32) -> (i32, i32, i32) {
    %c0_i32 = arith.constant 0 : i32
    %c0_i32_0 = arith.constant 0 : i32
    %c0_i32_1 = arith.constant 0 : i32
    return %arg0, %c0_i32, %c0_i32_0 : i32, i32, i32
  }
}

</mosaic_0001>

<llo_original>
// kernel: tpu_custom_call.1
$region0: #{tpu_custom_call.1}
  #allocation0 [shape = 'u32[]', space=smem, size = 0x4, offset = 0x4, fixed_abs, tag = 'smem constant byte address 0x4 - core index']
  #allocation1 [shape = 'u32[72,128]{1,0:T(1,128)}', space=vmem, size = 0x9000, scoped, tag = 'internal scratch']
  %s0 = inlined_call_operand.hbm [shape: f32[8,128], index: 0, kind: input, shape index: {}]
  %s1 = inlined_call_operand.hbm [shape: f32[8,128], index: 1, kind: input, shape index: {}]
  %s2 = inlined_call_operand.hbm [shape: f32[8,128], index: 2, kind: input, shape index: {}]
  %s3 = inlined_call_operand.hbm [shape: f32[1,8,128], index: 3, kind: output, shape index: {}]
  %s4 = sld [smem:[#allocation0]]
  $region38: #{tpu_custom_call.1} parent=0
    _
  %s6 = ssub.s32 1, %s4
  %s7 = scalar_select 0, %s6, %s4
  $region1: #{tpu_custom_call.1} parent=0
    #allocation2 [shape = 'u8[4096]{0}', space=vmem, size = 0x1000, scoped, tag = 'input window, operand 0, single buffered']
    #allocation3 [shape = 's32[1]{0}', space=sflag, size = 0x4, scoped, tag = 'scoped memory for tpu_custom_call.1']
    #allocation4 [shape = 's32[1]{0}', space=sflag, size = 0x4, scoped, tag = 'scoped memory for tpu_custom_call.1']
    #allocation5 [shape = 'u8[4096]{0}', space=vmem, size = 0x1000, scoped, tag = 'input window, operand 1, single buffered']
    #allocation6 [shape = 's32[1]{0}', space=sflag, size = 0x4, scoped, tag = 'scoped memory for tpu_custom_call.1']
    #allocation7 [shape = 'u8[4096]{0}', space=vmem, size = 0x1000, scoped, tag = 'input window, operand 2, single buffered']
    #allocation8 [shape = 'u8[4096]{0}', space=vmem, size = 0x1000, scoped, tag = 'output window, operand 0, single buffered']
    %8 = vsyncpa [#allocation3], 0
    %9 = vsyncpa [#allocation6], 0
    %10 = vsyncpa [#allocation4], 0
    // Predicated region
    $region2: #{tpu_custom_call.1} parent=1 // pred_check
      _
    $region3: #{tpu_custom_call.1} parent=1 // pred_check_branch
      %12 = sbr.rel (0) target = $region5
    $region4: #{tpu_custom_call.1} parent=1 // pred_region
      %s13 = sadd.s32 0, 0
      %15 = vsyncadd [#allocation3], 0
      %s16 = smul.addr %s13, 8
      %s17 = scalar_lea.hbm %s0, %s16
      %s19 = sshll.u32 %s17, 4
      %s20 = int_to_ptr.hbm [resolvable:$true] %s19
      %s21 = sshll.u32 [#allocation2], 4
      %s22 = int_to_ptr.vmem [resolvable:$true] %s21
      %24 = dma.hbm_to_vmem [thread:$0]  %s20, 128, %s22, [#allocation3]
    $region5: #{tpu_custom_call.1} parent=1 // pred_fallthru
      _
    // Predicated region
    $region6: #{tpu_custom_call.1} parent=1 // pred_check
      _
    $region7: #{tpu_custom_call.1} parent=1 // pred_check_branch
      %26 = sbr.rel (0) target = $region9
    $region8: #{tpu_custom_call.1} parent=1 // pred_region
      %s27 = sadd.s32 0, 0
      %29 = vsyncadd [#allocation6], 0
      %s30 = smul.addr %s27, 8
      %s31 = scalar_lea.hbm %s1, %s30
      %s33 = sshll.u32 %s31, 4
      %s34 = int_to_ptr.hbm [resolvable:$true] %s33
      %s35 = sshll.u32 [#allocation5], 4
      %s36 = int_to_ptr.vmem [resolvable:$true] %s35
      %38 = dma.hbm_to_vmem [thread:$0]  %s34, 128, %s36, [#allocation6]
    $region9: #{tpu_custom_call.1} parent=1 // pred_fallthru
      _
    // Predicated region
    $region10: #{tpu_custom_call.1} parent=1 // pred_check
      _
    $region11: #{tpu_custom_call.1} parent=1 // pred_check_branch
      %40 = sbr.rel (0) target = $region13
    $region12: #{tpu_custom_call.1} parent=1 // pred_region
      %s41 = sadd.s32 0, 0
      %43 = vsyncadd [#allocation6], 0
      %s44 = smul.addr %s41, 8
      %s45 = scalar_lea.hbm %s2, %s44
      %s47 = sshll.u32 %s45, 4
      %s48 = int_to_ptr.hbm [resolvable:$true] %s47
      %s49 = sshll.u32 [#allocation7], 4
      %s50 = int_to_ptr.vmem [resolvable:$true] %s49
      %52 = dma.hbm_to_vmem [thread:$0]  %s48, 128, %s50, [#allocation6]
    $region13: #{tpu_custom_call.1} parent=1 // pred_fallthru
      _
    // Predicated region
    $region14: #{tpu_custom_call.1} parent=1 // pred_check
      _
    $region15: #{tpu_custom_call.1} parent=1 // pred_check_branch
      %54 = sbr.rel (0) target = $region17
    $region16: #{tpu_custom_call.1} parent=1 // pred_region
      %56 = dma.done [#allocation3], 128
    $region17: #{tpu_custom_call.1} parent=1 // pred_fallthru
      _
    // Predicated region
    $region18: #{tpu_custom_call.1} parent=1 // pred_check
      _
    $region19: #{tpu_custom_call.1} parent=1 // pred_check_branch
      %58 = sbr.rel (0) target = $region21
    $region20: #{tpu_custom_call.1} parent=1 // pred_region
      %60 = dma.done [#allocation6], 128
    $region21: #{tpu_custom_call.1} parent=1 // pred_fallthru
      _
    // Predicated region
    $region22: #{tpu_custom_call.1} parent=1 // pred_check
      _
    $region23: #{tpu_custom_call.1} parent=1 // pred_check_branch
      %62 = sbr.rel (0) target = $region25
    $region24: #{tpu_custom_call.1} parent=1 // pred_region
      %64 = dma.done [#allocation6], 128
    $region25: #{tpu_custom_call.1} parent=1 // pred_fallthru
      _
    %s65 = sadd.s32 0, 0
    %s66 = sadd.s32 0, 0
    %s67 = sadd.s32 0, 0
    %p68 = scmp.eq.s32.totalorder 0, 0
    // Predicated region
    $region26: #{tpu_custom_call.1} parent=1 // pred_check
      %p69 = pneg %p68
    $region27: #{tpu_custom_call.1} parent=1 // pred_check_branch
      %71 = sbr.rel (%p69) target = $region29
    $region28: #{tpu_custom_call.1} parent=1 // pred_region
      %72 = vst [vmem:[#allocation8] sm:$0xff] 0.0
    $region29: #{tpu_custom_call.1} parent=1 // pred_fallthru
      _
    %v73 = vld [vmem:[#allocation5] sm:$0xff]
    %v74 = vld [vmem:[#allocation2] sm:$0xff]
    %v75 = vadd.f32 %v73, %v74
    %v76 = vld [vmem:[#allocation7] sm:$0xff]
    %v77 = vsub.f32 %v75, %v76
    %v78 = vld [vmem:[#allocation8] sm:$0xff]
    %v79 = vmul.f32 %v77, %v77
    %v80 = vadd.f32 %v78, %v79
    %81 = vst [vmem:[#allocation8] sm:$0xff] %v80
    // Predicated region
    $region30: #{tpu_custom_call.1} parent=1 // pred_check
      _
    $region31: #{tpu_custom_call.1} parent=1 // pred_check_branch
      %83 = sbr.rel (0) target = $region33
    $region32: #{tpu_custom_call.1} parent=1 // pred_region
      %85 = vsyncadd [#allocation4], 0
      %s87 = sshll.u32 [#allocation8], 4
      %s88 = int_to_ptr.vmem [resolvable:$true] %s87
      %s89 = sshll.u32 %s3, 4
      %s90 = int_to_ptr.hbm [resolvable:$true] %s89
      %92 = dma.vmem_to_hbm [thread:$0]  %s88, 128, %s90, [#allocation4]
    $region33: #{tpu_custom_call.1} parent=1 // pred_fallthru
      _
    // Predicated region
    $region34: #{tpu_custom_call.1} parent=1 // pred_check
      _
    $region35: #{tpu_custom_call.1} parent=1 // pred_check_branch
      %94 = sbr.rel (0) target = $region37
    $region36: #{tpu_custom_call.1} parent=1 // pred_region
      %96 = dma.done [#allocation4], 128
    $region37: #{tpu_custom_call.1} parent=1 // pred_fallthru
      _
    %97 = vsyncpa [#allocation3], 1
    %98 = vsyncpa [#allocation6], 1
    %99 = vsyncpa [#allocation4], 1

</llo_original>
